<compile_context>
chip_gen: v7x
topology: tpu7x:2x2x1
jax: 0.10.0
libtpu: 0.0.40
codegen_flags: <defaults>
</compile_context>

<pallas_src>
import functools

import jax
import jax.numpy as jnp
from jax.experimental import pallas as pl
from jax.experimental.pallas import tpu as pltpu


def _round_up(x, m):
    return ((x + m - 1) // m) * m


def focal_loss_kernel(logits_ref, labels_ref, out_ref, acc_ref, *,
                      alpha, gamma, n_valid):
    pid = pl.program_id(0)

    @pl.when(pid == 0)
    def _():
        acc_ref[...] = jnp.zeros_like(acc_ref)

    logits = logits_ref[...].astype(jnp.float32)   # (C, TN), lane-dense in N
    labels = labels_ref[...]                       # (1, TN) int32
    c, tn = logits.shape

    # softmax statistics along the class (sublane) axis
    m = jnp.max(logits, axis=0, keepdims=True)                    # (1, TN)
    sumexp = jnp.sum(jnp.exp(logits - m), axis=0, keepdims=True)  # (1, TN)

    # true-class logit via compare+select (no f32 one-hot, no full probs)
    class_ids = jax.lax.broadcasted_iota(jnp.int32, (c, tn), 0)
    logit_t = jnp.sum(jnp.where(class_ids == labels, logits, 0.0),
                      axis=0, keepdims=True)                      # (1, TN)

    log_pt = logit_t - m - jnp.log(sumexp)                        # (1, TN)
    pt = jnp.exp(log_pt)

    # alpha_t = alpha where label == 1 else (1 - alpha)  (parity with reference)
    alpha_t = jnp.where(labels == 1, jnp.float32(alpha),
                        jnp.float32(1.0 - alpha))

    one_minus_pt = 1.0 - pt
    if float(gamma) == float(int(gamma)) and gamma >= 0:
        # integer gamma: VALU multiplies instead of pow (= exp+log on the EUP)
        w = jnp.ones_like(one_minus_pt)
        for _ in range(int(gamma)):
            w = w * one_minus_pt
    else:
        w = one_minus_pt ** jnp.float32(gamma)

    # keep the reference's +1e-8 epsilon for exact forward parity
    loss = -alpha_t * w * jnp.log(pt + 1e-8)                      # (1, TN)

    # zero-out padded rows (global row index >= true N)
    row = jax.lax.broadcasted_iota(jnp.int32, (1, tn), 1) + pid * tn
    loss = jnp.where(row < n_valid, loss, 0.0)

    acc_ref[...] = acc_ref[...] + jnp.sum(loss, axis=1, keepdims=True)

    @pl.when(pid == pl.num_programs(0) - 1)
    def _():
        out_ref[...] = acc_ref[...] * jnp.float32(1.0 / n_valid)


def weighted_focal_loss(logits, labels, class_weights=None, alpha=0.75,
                        gamma=2.0, block_n=1024):
    # class_weights is stored by the PyTorch module but never used in forward.
    n, c = logits.shape

    # Lane-dense layout: class axis -> sublanes, batch axis -> lanes.
    # Keep the native dtype (bf16 stays bf16 in HBM; upcast happens in-kernel).
    logits_t = jnp.transpose(logits)                      # (C, N)
    labels_row = labels.astype(jnp.int32).reshape(1, n)   # (1, N)

    # Pad N up to a lane/tile multiple; choose tile size (block_n rows).
    n_pad = _round_up(n, 128)
    tn = min(int(block_n), n_pad)          # block_n must be a multiple of 128
    n_pad = _round_up(n_pad, tn)
    if n_pad != n:
        logits_t = jnp.pad(logits_t, ((0, 0), (0, n_pad - n)))
        labels_row = jnp.pad(labels_row, ((0, 0), (0, n_pad - n)))

    grid = (n_pad // tn,)

    out = pl.pallas_call(
        functools.partial(focal_loss_kernel, alpha=float(alpha),
                          gamma=float(gamma), n_valid=n),
        out_shape=jax.ShapeDtypeStruct((1, 1), jnp.float32),
        grid_spec=pltpu.PrefetchScalarGridSpec(
            num_scalar_prefetch=0,
            grid=grid,
            in_specs=[
                pl.BlockSpec((c, tn), lambda i: (0, i)),
                pl.BlockSpec((1, tn), lambda i: (0, i)),
            ],
            out_specs=pl.BlockSpec((1, 1), lambda i: (0, 0)),
            scratch_shapes=[pltpu.VMEM((1, 1), jnp.float32)],
        ),
        compiler_params=pltpu.CompilerParams(
            dimension_semantics=("arbitrary",)),
        # TODO(synk): on v7x, add a leading "parallel" N-half axis with
        # per-core partial sums to use both TensorCores.
    )(logits_t, labels_row)
    return out[0, 0]


def _reference(logits, labels, alpha=0.75, gamma=2.0):
    probs = jax.nn.softmax(logits.astype(jnp.float32), axis=1)
    one_hot = jax.nn.one_hot(labels, logits.shape[1], dtype=jnp.float32)
    pt = jnp.sum(probs * one_hot, axis=1)
    alpha_t = jnp.where(labels == 1, alpha, 1.0 - alpha)
    loss = -alpha_t * (1.0 - pt) ** gamma * jnp.log(pt + 1e-8)
    return jnp.mean(loss)


if __name__ == "__main__":
    key = jax.random.PRNGKey(0)

    # Test 1: tiny shape matching the module's implied forward (batch=8, C=4)
    k_logits, k_labels = jax.random.split(key)
    N, C = 8, 4
    logits = jax.random.normal(k_logits, (N, C), dtype=jnp.float32)
    labels = jax.random.randint(k_labels, (N,), 0, C, dtype=jnp.int32)
    class_weights = jnp.ones((C,), dtype=jnp.float32)   # unused in forward

    out = weighted_focal_loss(logits, labels, class_weights,
                              alpha=0.75, gamma=2.0)
    out = jax.block_until_ready(out)
    ref = _reference(logits, labels, alpha=0.75, gamma=2.0)
    assert jnp.allclose(out, ref, atol=1e-5, rtol=1e-5), (out, ref)

    # Test 2: exercises multi-step grid accumulation + remainder masking
    k2_logits, k2_labels = jax.random.split(jax.random.PRNGKey(1))
    N2, C2 = 300, 4
    logits2 = jax.random.normal(k2_logits, (N2, C2), dtype=jnp.float32)
    labels2 = jax.random.randint(k2_labels, (N2,), 0, C2, dtype=jnp.int32)

    out2 = weighted_focal_loss(logits2, labels2, None,
                               alpha=0.75, gamma=2.0, block_n=128)
    out2 = jax.block_until_ready(out2)
    ref2 = _reference(logits2, labels2, alpha=0.75, gamma=2.0)
    assert jnp.allclose(out2, ref2, atol=1e-5, rtol=1e-5), (out2, ref2)

    print("KERNEL_OK")
</pallas_src>

<mosaic_0001>
module attributes {stable_mosaic.version = 11 : i64} {
  func.func @focal_loss_kernel(%arg0: i32, %arg1: memref<4x128xf32, #tpu.memory_space<vmem>>, %arg2: memref<1x128xi32, #tpu.memory_space<vmem>>, %arg3: memref<1x1xf32, #tpu.memory_space<vmem>>, %arg4: memref<1x1xf32, #tpu.memory_space<vmem>>) attributes {dimension_semantics = [#tpu.dimension_semantics<arbitrary>], iteration_bounds = array<i64: 1>, scalar_prefetch = 0 : i64, scratch_operands = 1 : i64, tpu.core_type = #tpu.core_type<tc>, window_params = [{transform_indices = @transform_0, window_bounds = array<i64: 4, 128>}, {transform_indices = @transform_1, window_bounds = array<i64: 1, 128>}, {pipeline_mode = #tpu.pipeline_mode<synchronous>, transform_indices = @transform_2, window_bounds = array<i64: 1, 1>}]} {
    %c0_i32 = arith.constant 0 : i32
    %0 = arith.cmpi eq, %arg0, %c0_i32 : i32
    %1 = arith.extui %0 : i1 to i32
    %c0_i32_0 = arith.constant 0 : i32
    %2 = arith.cmpi ne, %1, %c0_i32_0 : i32
    scf.if %2 {
      %cst_21 = arith.constant 0.000000e+00 : f32
      %56 = vector.broadcast %cst_21 : f32 to vector<1x1xf32>
      %c0_22 = arith.constant 0 : index
      %c0_23 = arith.constant 0 : index
      %57 = vector.load %arg4[%c0_22, %c0_23] : memref<1x1xf32, #tpu.memory_space<vmem>>, vector<1x1xf32>
      tpu.vector_store %arg4[%c0_22, %c0_23], %56 {strides = array<i32>} : memref<1x1xf32, #tpu.memory_space<vmem>>, vector<1x1xf32>,
    } else {
    }
    %c0 = arith.constant 0 : index
    %c0_1 = arith.constant 0 : index
    %3 = vector.load %arg1[%c0, %c0_1] : memref<4x128xf32, #tpu.memory_space<vmem>>, vector<4x128xf32>
    %c0_2 = arith.constant 0 : index
    %c0_3 = arith.constant 0 : index
    %4 = vector.load %arg2[%c0_2, %c0_3] : memref<1x128xi32, #tpu.memory_space<vmem>>, vector<1x128xi32>
    %cst = arith.constant dense<0xFF800000> : vector<128xf32>
    %5 = vector.multi_reduction <maximumf>, %3, %cst [0] : vector<4x128xf32> to vector<128xf32>
    %6 = vector.shape_cast %5 : vector<128xf32> to vector<1x128xf32>
    %7 = vector.broadcast %6 : vector<1x128xf32> to vector<4x128xf32>
    %8 = arith.subf %3, %7 : vector<4x128xf32>
    %9 = math.exp %8 : vector<4x128xf32>
    %cst_4 = arith.constant dense<0.000000e+00> : vector<128xf32>
    %10 = vector.multi_reduction <add>, %9, %cst_4 [0] : vector<4x128xf32> to vector<128xf32>
    %11 = vector.shape_cast %10 : vector<128xf32> to vector<1x128xf32>
    %12 = tpu.iota {dimensions = array<i32: 0>} : vector<4x128xi32>
    %13 = vector.broadcast %4 : vector<1x128xi32> to vector<4x128xi32>
    %14 = arith.cmpi eq, %12, %13 : vector<4x128xi32>
    %cst_5 = arith.constant 0.000000e+00 : f32
    %15 = vector.broadcast %cst_5 : f32 to vector<4x128xf32>
    %16 = arith.select %14, %3, %15 : vector<4x128xi1>, vector<4x128xf32>
    %cst_6 = arith.constant dense<0.000000e+00> : vector<128xf32>
    %17 = vector.multi_reduction <add>, %16, %cst_6 [0] : vector<4x128xf32> to vector<128xf32>
    %18 = vector.shape_cast %17 : vector<128xf32> to vector<1x128xf32>
    %19 = arith.subf %18, %6 : vector<1x128xf32>
    %20 = math.log %11 : vector<1x128xf32>
    %21 = arith.subf %19, %20 : vector<1x128xf32>
    %22 = math.exp %21 : vector<1x128xf32>
    %c1_i32 = arith.constant 1 : i32
    %23 = vector.broadcast %c1_i32 : i32 to vector<1x128xi32>
    %24 = arith.cmpi eq, %4, %23 : vector<1x128xi32>
    %cst_7 = arith.constant 7.500000e-01 : f32
    %cst_8 = arith.constant 2.500000e-01 : f32
    %25 = vector.broadcast %cst_7 : f32 to vector<1x128xf32>
    %26 = vector.broadcast %cst_8 : f32 to vector<1x128xf32>
    %27 = arith.select %24, %25, %26 : vector<1x128xi1>, vector<1x128xf32>
    %cst_9 = arith.constant 1.000000e+00 : f32
    %28 = vector.broadcast %cst_9 : f32 to vector<1x128xf32>
    %29 = arith.subf %28, %22 : vector<1x128xf32>
    %cst_10 = arith.constant 1.000000e+00 : f32
    %30 = vector.broadcast %cst_10 : f32 to vector<1x128xf32>
    %31 = arith.mulf %30, %29 : vector<1x128xf32>
    %32 = arith.mulf %31, %29 : vector<1x128xf32>
    %cst_11 = arith.constant 0.000000e+00 : f32
    %33 = vector.broadcast %cst_11 : f32 to vector<1x128xf32>
    %34 = arith.subf %33, %27 : vector<1x128xf32>
    %35 = arith.mulf %34, %32 : vector<1x128xf32>
    %cst_12 = arith.constant 9.99999993E-9 : f32
    %36 = vector.broadcast %cst_12 : f32 to vector<1x128xf32>
    %37 = arith.addf %22, %36 : vector<1x128xf32>
    %38 = math.log %37 : vector<1x128xf32>
    %39 = arith.mulf %35, %38 : vector<1x128xf32>
    %40 = tpu.iota {dimensions = array<i32: 1>} : vector<1x128xi32>
    %c128_i32 = arith.constant 128 : i32
    %41 = arith.muli %arg0, %c128_i32 : i32
    %42 = vector.broadcast %41 : i32 to vector<1x128xi32>
    %43 = arith.addi %40, %42 : vector<1x128xi32>
    %c8_i32 = arith.constant 8 : i32
    %44 = vector.broadcast %c8_i32 : i32 to vector<1x128xi32>
    %45 = arith.cmpi slt, %43, %44 : vector<1x128xi32>
    %cst_13 = arith.constant 0.000000e+00 : f32
    %46 = vector.broadcast %cst_13 : f32 to vector<1x128xf32>
    %47 = arith.select %45, %39, %46 : vector<1x128xi1>, vector<1x128xf32>
    %c0_14 = arith.constant 0 : index
    %c0_15 = arith.constant 0 : index
    %48 = vector.load %arg4[%c0_14, %c0_15] : memref<1x1xf32, #tpu.memory_space<vmem>>, vector<1x1xf32>
    %cst_16 = arith.constant dense<0.000000e+00> : vector<1xf32>
    %49 = vector.multi_reduction <add>, %47, %cst_16 [1] : vector<1x128xf32> to vector<1xf32>
    %50 = vector.shape_cast %49 : vector<1xf32> to vector<1x1xf32>
    %51 = arith.addf %48, %50 : vector<1x1xf32>
    %c0_17 = arith.constant 0 : index
    %c0_18 = arith.constant 0 : index
    %52 = vector.load %arg4[%c0_17, %c0_18] : memref<1x1xf32, #tpu.memory_space<vmem>>, vector<1x1xf32>
    tpu.vector_store %arg4[%c0_17, %c0_18], %51 {strides = array<i32>} : memref<1x1xf32, #tpu.memory_space<vmem>>, vector<1x1xf32>,
    %c0_i32_19 = arith.constant 0 : i32
    %53 = arith.cmpi eq, %arg0, %c0_i32_19 : i32
    %54 = arith.extui %53 : i1 to i32
    %c0_i32_20 = arith.constant 0 : i32
    %55 = arith.cmpi ne, %54, %c0_i32_20 : i32
    scf.if %55 {
      %c0_21 = arith.constant 0 : index
      %c0_22 = arith.constant 0 : index
      %56 = vector.load %arg4[%c0_21, %c0_22] : memref<1x1xf32, #tpu.memory_space<vmem>>, vector<1x1xf32>
      %cst_23 = arith.constant 1.250000e-01 : f32
      %57 = vector.broadcast %cst_23 : f32 to vector<1x1xf32>
      %58 = arith.mulf %56, %57 : vector<1x1xf32>
      %c0_24 = arith.constant 0 : index
      %c0_25 = arith.constant 0 : index
      %59 = vector.load %arg3[%c0_24, %c0_25] : memref<1x1xf32, #tpu.memory_space<vmem>>, vector<1x1xf32>
      tpu.vector_store %arg3[%c0_24, %c0_25], %58 {strides = array<i32>} : memref<1x1xf32, #tpu.memory_space<vmem>>, vector<1x1xf32>,
    } else {
    }
    return
  }
  func.func @transform_0(%arg0: i32) -> (i32, i32) {
    %c0_i32 = arith.constant 0 : i32
    %c0_i32_0 = arith.constant 0 : i32
    return %c0_i32, %arg0 : i32, i32
  }
  func.func @transform_1(%arg0: i32) -> (i32, i32) {
    %c0_i32 = arith.constant 0 : i32
    %c0_i32_0 = arith.constant 0 : i32
    return %c0_i32, %arg0 : i32, i32
  }
  func.func @transform_2(%arg0: i32) -> (i32, i32) {
    %c0_i32 = arith.constant 0 : i32
    %c0_i32_0 = arith.constant 0 : i32
    %c0_i32_1 = arith.constant 0 : i32
    return %c0_i32, %c0_i32_0 : i32, i32
  }
}

</mosaic_0001>

<llo_original>
// kernel: tpu_custom_call.1
$region0: #{tpu_custom_call.1}
  #allocation0 [shape = 'u32[]', space=smem, size = 0x4, offset = 0x4, fixed_abs, tag = 'smem constant byte address 0x4 - core index']
  #allocation1 [shape = 'u32[144,128]{1,0:T(1,128)}', space=vmem, size = 0x12000, scoped, tag = 'internal scratch']
  #allocation2 [shape = 'f32[1,1]{1,0:T(1,128)}', space=vmem, size = 0x200, scoped, tag = 'scratch operand']
  %s0 = inlined_call_operand.hbm [shape: f32[4,128], index: 0, kind: input, shape index: {}]
  %s1 = inlined_call_operand.vmem [shape: s32[1,128], index: 1, kind: input, shape index: {}]
  %s2 = inlined_call_operand.hbm [shape: f32[1,1], index: 2, kind: output, shape index: {}]
  %s3 = sld [smem:[#allocation0]]
  $region30: #{tpu_custom_call.1} parent=0
    _
  %s5 = ssub.s32 1, %s3
  %s6 = scalar_select 0, %s5, %s3
  $region1: #{tpu_custom_call.1} parent=0
    #allocation3 [shape = 'u8[2048]{0}', space=vmem, size = 0x800, scoped, tag = 'input window, operand 0, single buffered']
    #allocation4 [shape = 's32[1]{0}', space=sflag, size = 0x4, scoped, tag = 'scoped memory for tpu_custom_call.1']
    #allocation5 [shape = 's32[1]{0}', space=sflag, size = 0x4, scoped, tag = 'scoped memory for tpu_custom_call.1']
    #allocation6 [shape = 'u8[512]{0}', space=vmem, size = 0x400, scoped, tag = 'output window, operand 0, single buffered']
    %7 = vsyncpa [#allocation4], 0
    %8 = vsyncpa [#allocation5], 0
    // Predicated region
    $region2: #{tpu_custom_call.1} parent=1 // pred_check
      _
    $region3: #{tpu_custom_call.1} parent=1 // pred_check_branch
      %10 = sbr.rel (0) target = $region5
    $region4: #{tpu_custom_call.1} parent=1 // pred_region
      %s12 = ssub.s32 64, 64
      %13 = vsyncadd [#allocation4], %s12
      %s15 = sshll.u32 [#allocation3], 4
      %s16 = int_to_ptr.vmem [resolvable:$true] %s15
      %18 = dma.hbm_to_vmem [thread:$0]  %s0, 64, %s16, [#allocation4]
    $region5: #{tpu_custom_call.1} parent=1 // pred_fallthru
      _
    // Predicated region
    $region6: #{tpu_custom_call.1} parent=1 // pred_check
      _
    $region7: #{tpu_custom_call.1} parent=1 // pred_check_branch
      %20 = sbr.rel (0) target = $region9
    $region8: #{tpu_custom_call.1} parent=1 // pred_region
      _
    $region9: #{tpu_custom_call.1} parent=1 // pred_fallthru
      _
    // Predicated region
    $region10: #{tpu_custom_call.1} parent=1 // pred_check
      _
    $region11: #{tpu_custom_call.1} parent=1 // pred_check_branch
      %22 = sbr.rel (0) target = $region13
    $region12: #{tpu_custom_call.1} parent=1 // pred_region
      %23 = dma.done [#allocation4], 64
    $region13: #{tpu_custom_call.1} parent=1 // pred_fallthru
      _
    %p24 = scmp.eq.s32.totalorder 0, 0
    // Predicated region
    $region14: #{tpu_custom_call.1} parent=1 // pred_check
      %p25 = pneg %p24
    $region15: #{tpu_custom_call.1} parent=1 // pred_check_branch
      %27 = sbr.rel (%p25) target = $region17
    $region16: #{tpu_custom_call.1} parent=1 // pred_region
      %vm28 = vcmask 0
      %29 = vst.msk [vmem:[#allocation2] sm:$0x1] %vm28, 0.0
    $region17: #{tpu_custom_call.1} parent=1 // pred_fallthru
      _
    %v30 = vld [vmem:[#allocation3] sm:$0xf]
    %v31 = vld [vmem:[%s1] sm:$0x1]
    %vm32 = vcmask 1043456
    %v33 = vsel %vm32, %v30, -inf
    %v34 = vrot.slane %v33, 4
    %v35 = vmax.f32 %v33, %v34
    %v36 = vrot.slane %v35, 2
    %v37 = vmax.f32 %v35, %v36
    %v38 = vrot.slane %v37, 1
    %v39 = vmax.f32 %v37, %v38
    %v40 = vsub.f32 %v30, %v39
    %v41 = vmul.f32 %v40, 1.442695
    %v42 = vpow.pop %v41
    %v43 = vsel %vm32, %v42, 0.0
    %v44 = vrot.slane %v43, 4
    %v45 = vadd.f32 %v43, %v44
    %v46 = vrot.slane %v45, 2
    %v47 = vadd.f32 %v45, %v46
    %v48 = vrot.slane %v47, 1
    %v49 = vadd.f32 %v47, %v48
    %v50 = vlaneseq
    %v51 = vshrl.u32 %v50, 7
    %v52 = vlaneseq
    %v53 = vshrl.u32 %v52, 7
    %v54 = vsub.s32 0, %v53
    %v55 = vrot.slane %v31, %v54
    %vm56 = vcmp.eq.s32.totalorder %v51, %v55
    %v57 = vsel %vm56, %v30, 0.0
    %v58 = vsel %vm32, %v57, 0.0
    %v59 = vrot.slane %v58, 4
    %v60 = vadd.f32 %v58, %v59
    %v61 = vrot.slane %v60, 2
    %v62 = vadd.f32 %v60, %v61
    %v63 = vrot.slane %v62, 1
    %v64 = vadd.f32 %v62, %v63
    %v65 = vsub.f32 %v64, %v39
    %v66 = vlog2.pop %v49
    %v67 = vmul.f32 %v66, 0.6931472
    %v68 = vsub.f32 %v65, %v67
    %v69 = vmul.f32 %v68, 1.442695
    %v70 = vpow.pop %v69
    %vm71 = vcmp.eq.s32.totalorder %v31, 1
    %v72 = vsel %vm71, 0.75, 0.25
    %v73 = vsub.f32 1.0, %v70
    %v74 = vmul.f32 %v73, %v73
    %v75 = vsub.f32 0.0, %v72
    %v76 = vmul.f32 %v75, %v74
    %v77 = vadd.f32 %v70, 1e-08
    %v78 = vlog2.pop %v77
    %v79 = vmul.f32 %v78, 0.6931472
    %v80 = vmul.f32 %v76, %v79
    %v81 = vlaneseq
    %v82 = vand.u32 %v81, 127
    %s83 = smul.u32 0, 128
    %v84 = vstv %s83
    %v85 = vadd.s32 %v82, %v84
    %vm86 = vcmp.lt.s32.totalorder %v85, 8
    %v87 = vsel %vm86, %v80, 0.0
    %v88 = vld [vmem:[#allocation2] sm:$0x1]
    %vm89 = vcmask 1040384
    %v90 = vsel %vm89, %v87, 0.0
    %91 = vadd.xlane.f32.xlu0 %v90
    %v92 = vpop.xlane.xlu0 %91
    %v93 = vadd.f32 %v88, %v92
    %vm94 = vcmask 0
    %95 = vst.msk [vmem:[#allocation2] sm:$0x1] %vm94, %v93
    // Predicated region
    $region18: #{tpu_custom_call.1} parent=1 // pred_check
      %p96 = pneg %p24
    $region19: #{tpu_custom_call.1} parent=1 // pred_check_branch
      %98 = sbr.rel (%p96) target = $region21
    $region20: #{tpu_custom_call.1} parent=1 // pred_region
      %v99 = vld [vmem:[#allocation2] sm:$0x1]
      %v100 = vmul.f32 %v99, 0.125
      %101 = vst.msk [vmem:[#allocation6] sm:$0x1] %vm94, %v100
    $region21: #{tpu_custom_call.1} parent=1 // pred_fallthru
      _
    // Predicated region
    $region22: #{tpu_custom_call.1} parent=1 // pred_check
      _
    $region23: #{tpu_custom_call.1} parent=1 // pred_check_branch
      %103 = sbr.rel (0) target = $region25
    $region24: #{tpu_custom_call.1} parent=1 // pred_region
      %s105 = ssub.s32 16, 16
      %106 = vsyncadd [#allocation5], %s105
      %s108 = sshll.u32 [#allocation6], 4
      %s109 = int_to_ptr.vmem [resolvable:$true] %s108
      %111 = dma.vmem_to_hbm [thread:$0]  %s109, 16, %s2, [#allocation5]
    $region25: #{tpu_custom_call.1} parent=1 // pred_fallthru
      _
    // Predicated region
    $region26: #{tpu_custom_call.1} parent=1 // pred_check
      _
    $region27: #{tpu_custom_call.1} parent=1 // pred_check_branch
      %113 = sbr.rel (0) target = $region29
    $region28: #{tpu_custom_call.1} parent=1 // pred_region
      %114 = dma.done [#allocation5], 16
    $region29: #{tpu_custom_call.1} parent=1 // pred_fallthru
      _
    %115 = vsyncpa [#allocation4], 1
    %116 = vsyncpa [#allocation5], 1

</llo_original>
